<compile_context>
chip_gen: v7x
topology: tpu7x:2x2x1
jax: 0.10.0
libtpu: 0.0.40
codegen_flags: <defaults>
</compile_context>

<pallas_src>
import jax
import jax.numpy as jnp
from jax.experimental import pallas as pl
from jax.experimental.pallas import tpu as pltpu


# Upper bound on rows per grid step. Big enough to amortize per-step overhead,
# small enough that (2 x input buf + 2 x output buf + weights + f32 temporaries)
# stays a few MiB, far under every generation's scoped-VMEM limit.
TILE_B = 4096


def _round_up(x, m):
    return ((x + m - 1) // m) * m


def _bf16_activations_ok():
    """bf16 VPU/EUP exists on v6e/v7x; v5e and older want f32 tanh/bias math."""
    try:
        kind = jax.devices()[0].device_kind.lower()
    except Exception:
        return False
    return not any(t in kind for t in ("v2", "v3", "v4", "v5"))


def _make_kernel(bf16_act):
    bf16 = jnp.bfloat16
    f32 = jnp.float32

    def kernel(
        x_ref,                       # [tb, n_input]   f32 (cast to bf16 in-kernel)
        w1_ref, b1_ref,              # [n_input, 64] bf16, [1, 64] f32
        w2_ref, b2_ref,              # [64, 64]      bf16, [1, 64] f32
        w34_ref, b34_ref,            # [64, 64]      bf16, [1, 64] f32  (W3@W4 folded)
        w5_ref, b5_ref,              # [64, 64]      bf16, [1, 64] f32
        w6_ref, b6_ref,              # [64, n_out]   bf16, [1, n_out] f32
        o_ref,                       # [tb, n_out]   f32
    ):
        def matmul(h, w_ref):
            # MXU matmul with bf16 operands, f32 accumulation.
            return jnp.dot(h, w_ref[...], preferred_element_type=f32)

        def hidden(h, w_ref, b_ref):
            z = matmul(h, w_ref) + b_ref[...]            # f32 accumulate + bias (VPU)
            if bf16_act:
                # v6e/v7x: cast BEFORE tanh -> bf16 EUP packs 2x elements per vreg.
                return jnp.tanh(z.astype(bf16))
            # v5e: no bf16 EUP/VPU -> tanh in f32, cast after for the next MXU op.
            return jnp.tanh(z).astype(bf16)

        # In-kernel f32 -> bf16 cast (VPU op hidden under MXU/EUP) replaces the
        # former wrapper-side XLA cast pass over HBM.
        x = x_ref[...].astype(bf16)
        h = hidden(x, w1_ref, b1_ref)        # feat hidden 1
        h = hidden(h, w2_ref, b2_ref)        # feat hidden 2
        h = hidden(h, w34_ref, b34_ref)      # feat out + output hidden 1 (fused)
        h = hidden(h, w5_ref, b5_ref)        # output hidden 2
        # Final layer: no activation. n_output (16) < 128 lanes -> masked store;
        # kept as-is (see header note on the lane-dense fold trade-off).
        o_ref[...] = (matmul(h, w6_ref) + b6_ref[...]).astype(o_ref.dtype)

    return kernel


def init_params(key, n_input, n_output, feature_dim=20,
                feat_hidden=(64, 64), output_hidden=(64, 64)):
    """Deterministic PyTorch-style (uniform +-1/sqrt(fan_in)) init.

    Weights stored as [in, out] (already transposed for x @ W).
    Biases stored as [1, out] so they broadcast over the batch dim.
    """
    dims = ([n_input] + list(feat_hidden) + [feature_dim]
            + list(output_hidden) + [n_output])
    params = []
    for i in range(len(dims) - 1):
        fan_in, fan_out = dims[i], dims[i + 1]
        key, kw, kb = jax.random.split(key, 3)
        bound = 1.0 / (fan_in ** 0.5)
        w = jax.random.uniform(kw, (fan_in, fan_out), jnp.float32, -bound, bound)
        b = jax.random.uniform(kb, (1, fan_out), jnp.float32, -bound, bound)
        params.append((w, b))
    return params


def _choose_tile(batch, tile_b):
    # Keep >= 4 grid steps when the batch allows (>= 2 per TensorCore on v7x
    # megacore) so both cores get work and the input/output DMAs double-buffer
    # behind compute; tiles stay a multiple of 8 sublanes.
    tb = _round_up(pl.cdiv(batch, 4), 8)
    return max(8, min(tb, tile_b))


def vanilla_model_forward(x, params, tile_b=TILE_B):
    """x: [batch, n_input] float32 -> [batch, n_output] float32."""
    batch, n_input = x.shape
    (w1, b1), (w2, b2), (w3, b3), (w4, b4), (w5, b5), (w6, b6) = params
    n_output = w6.shape[1]

    # Fold the activation-free feat_model output layer (feature_dim wide, poor
    # MXU utilization) into the first output_model layer (exact in f32):
    #   (h@W3 + b3)@W4 + b4 == h@(W3@W4) + (b3@W4 + b4).
    # Valid only because feat_activation is None in the reference module.
    w34 = w3 @ w4
    b34 = b3 @ w4 + b4

    # bf16 MXU operands; biases stay f32 (added to the f32 accumulator).
    ws = [w.astype(jnp.bfloat16) for w in (w1, w2, w34, w5, w6)]
    bs = [b1, b2, b34, b5, b6]

    tb = _choose_tile(batch, tile_b)
    grid = (pl.cdiv(batch, tb),)   # ragged last block handled by Pallas masking;
                                   # no pad / slice HBM passes (rows independent)

    resident = lambda i: (0, 0)    # constant index map -> weights stay VMEM-resident
    in_specs = [pl.BlockSpec((tb, n_input), lambda i: (i, 0))]
    flat_params = []
    for w, b in zip(ws, bs):
        in_specs.append(pl.BlockSpec(w.shape, resident))
        in_specs.append(pl.BlockSpec(b.shape, resident))
        flat_params.extend([w, b])

    kernel = _make_kernel(_bf16_activations_ok())

    return pl.pallas_call(
        kernel,
        out_shape=jax.ShapeDtypeStruct((batch, n_output), jnp.float32),
        grid=grid,
        in_specs=in_specs,
        out_specs=pl.BlockSpec((tb, n_output), lambda i: (i, 0)),
        compiler_params=pltpu.CompilerParams(
            dimension_semantics=("parallel",),   # megacore sharding on v7x
        ),
    )(x, *flat_params)


if __name__ == "__main__":
    key = jax.random.PRNGKey(0)
    batch, n_input, n_output, feature_dim = 8, 32, 16, 20

    key, kx, kp = jax.random.split(key, 3)
    x = jax.random.normal(kx, (batch, n_input), jnp.float32)
    params = init_params(kp, n_input, n_output, feature_dim)

    out = vanilla_model_forward(x, params)
    jax.block_until_ready(out)

    # Pure-JAX f32 reference (original, un-fused layer order).
    ref = x
    for i, (w, b) in enumerate(params):
        ref = ref @ w + b
        # tanh after every layer except the last of each sub-MLP
        # (layers 0,1 of feat_model and 3,4 of output_model).
        if i in (0, 1, 3, 4):
            ref = jnp.tanh(ref)

    assert out.shape == (batch, n_output)
    # bf16 matmul operands / bf16 tanh arguments (f32 accumulation) -> relaxed
    # tolerance vs the f32 reference.
    assert jnp.allclose(out, ref, atol=5e-2, rtol=5e-2), (
        float(jnp.max(jnp.abs(out - ref))))

    print("KERNEL_OK")
</pallas_src>

<mosaic_0001>
module attributes {stable_mosaic.version = 11 : i64} {
  func.func @kernel(%arg0: i32, %arg1: memref<8x32xf32, #tpu.memory_space<vmem>>, %arg2: memref<32x64xbf16, #tpu.memory_space<vmem>>, %arg3: memref<1x64xf32, #tpu.memory_space<vmem>>, %arg4: memref<64x64xbf16, #tpu.memory_space<vmem>>, %arg5: memref<1x64xf32, #tpu.memory_space<vmem>>, %arg6: memref<64x64xbf16, #tpu.memory_space<vmem>>, %arg7: memref<1x64xf32, #tpu.memory_space<vmem>>, %arg8: memref<64x64xbf16, #tpu.memory_space<vmem>>, %arg9: memref<1x64xf32, #tpu.memory_space<vmem>>, %arg10: memref<64x16xbf16, #tpu.memory_space<vmem>>, %arg11: memref<1x16xf32, #tpu.memory_space<vmem>>, %arg12: memref<8x16xf32, #tpu.memory_space<vmem>>) attributes {dimension_semantics = [#tpu.dimension_semantics<parallel>], iteration_bounds = array<i64: 1>, scalar_prefetch = 0 : i64, scratch_operands = 0 : i64, tpu.core_type = #tpu.core_type<tc>, window_params = [{transform_indices = @transform_0, window_bounds = array<i64: 8, 32>}, {pipeline_mode = #tpu.pipeline_mode<synchronous>, transform_indices = @transform_1, window_bounds = array<i64: 32, 64>}, {pipeline_mode = #tpu.pipeline_mode<synchronous>, transform_indices = @transform_2, window_bounds = array<i64: 1, 64>}, {pipeline_mode = #tpu.pipeline_mode<synchronous>, transform_indices = @transform_3, window_bounds = array<i64: 64, 64>}, {pipeline_mode = #tpu.pipeline_mode<synchronous>, transform_indices = @transform_4, window_bounds = array<i64: 1, 64>}, {pipeline_mode = #tpu.pipeline_mode<synchronous>, transform_indices = @transform_5, window_bounds = array<i64: 64, 64>}, {pipeline_mode = #tpu.pipeline_mode<synchronous>, transform_indices = @transform_6, window_bounds = array<i64: 1, 64>}, {pipeline_mode = #tpu.pipeline_mode<synchronous>, transform_indices = @transform_7, window_bounds = array<i64: 64, 64>}, {pipeline_mode = #tpu.pipeline_mode<synchronous>, transform_indices = @transform_8, window_bounds = array<i64: 1, 64>}, {pipeline_mode = #tpu.pipeline_mode<synchronous>, transform_indices = @transform_9, window_bounds = array<i64: 64, 16>}, {pipeline_mode = #tpu.pipeline_mode<synchronous>, transform_indices = @transform_10, window_bounds = array<i64: 1, 16>}, {transform_indices = @transform_11, window_bounds = array<i64: 8, 16>}]} {
    %c0 = arith.constant 0 : index
    %c0_0 = arith.constant 0 : index
    %0 = vector.load %arg1[%c0, %c0_0] : memref<8x32xf32, #tpu.memory_space<vmem>>, vector<8x32xf32>
    %1 = arith.truncf %0 : vector<8x32xf32> to vector<8x32xbf16>
    %c0_1 = arith.constant 0 : index
    %c0_2 = arith.constant 0 : index
    %2 = vector.load %arg2[%c0_1, %c0_2] : memref<32x64xbf16, #tpu.memory_space<vmem>>, vector<32x64xbf16>
    %cst = arith.constant dense<0.000000e+00> : vector<8x64xf32>
    %3 = tpu.matmul %1, %2, %cst {dimension_numbers = #tpu.dot_dimension_numbers<[1], [0], [0], [1], [0, 0, 1, 1], [], []>} : vector<8x32xbf16>, vector<32x64xbf16>, vector<8x64xf32> -> vector<8x64xf32>
    %c0_3 = arith.constant 0 : index
    %c0_4 = arith.constant 0 : index
    %4 = vector.load %arg3[%c0_3, %c0_4] : memref<1x64xf32, #tpu.memory_space<vmem>>, vector<1x64xf32>
    %5 = vector.broadcast %4 : vector<1x64xf32> to vector<8x64xf32>
    %6 = arith.addf %3, %5 : vector<8x64xf32>
    %7 = arith.truncf %6 : vector<8x64xf32> to vector<8x64xbf16>
    %8 = math.tanh %7 : vector<8x64xbf16>
    %c0_5 = arith.constant 0 : index
    %c0_6 = arith.constant 0 : index
    %9 = vector.load %arg4[%c0_5, %c0_6] : memref<64x64xbf16, #tpu.memory_space<vmem>>, vector<64x64xbf16>
    %cst_7 = arith.constant dense<0.000000e+00> : vector<8x64xf32>
    %10 = tpu.matmul %8, %9, %cst_7 {dimension_numbers = #tpu.dot_dimension_numbers<[1], [0], [0], [1], [0, 0, 1, 1], [], []>} : vector<8x64xbf16>, vector<64x64xbf16>, vector<8x64xf32> -> vector<8x64xf32>
    %c0_8 = arith.constant 0 : index
    %c0_9 = arith.constant 0 : index
    %11 = vector.load %arg5[%c0_8, %c0_9] : memref<1x64xf32, #tpu.memory_space<vmem>>, vector<1x64xf32>
    %12 = vector.broadcast %11 : vector<1x64xf32> to vector<8x64xf32>
    %13 = arith.addf %10, %12 : vector<8x64xf32>
    %14 = arith.truncf %13 : vector<8x64xf32> to vector<8x64xbf16>
    %15 = math.tanh %14 : vector<8x64xbf16>
    %c0_10 = arith.constant 0 : index
    %c0_11 = arith.constant 0 : index
    %16 = vector.load %arg6[%c0_10, %c0_11] : memref<64x64xbf16, #tpu.memory_space<vmem>>, vector<64x64xbf16>
    %cst_12 = arith.constant dense<0.000000e+00> : vector<8x64xf32>
    %17 = tpu.matmul %15, %16, %cst_12 {dimension_numbers = #tpu.dot_dimension_numbers<[1], [0], [0], [1], [0, 0, 1, 1], [], []>} : vector<8x64xbf16>, vector<64x64xbf16>, vector<8x64xf32> -> vector<8x64xf32>
    %c0_13 = arith.constant 0 : index
    %c0_14 = arith.constant 0 : index
    %18 = vector.load %arg7[%c0_13, %c0_14] : memref<1x64xf32, #tpu.memory_space<vmem>>, vector<1x64xf32>
    %19 = vector.broadcast %18 : vector<1x64xf32> to vector<8x64xf32>
    %20 = arith.addf %17, %19 : vector<8x64xf32>
    %21 = arith.truncf %20 : vector<8x64xf32> to vector<8x64xbf16>
    %22 = math.tanh %21 : vector<8x64xbf16>
    %c0_15 = arith.constant 0 : index
    %c0_16 = arith.constant 0 : index
    %23 = vector.load %arg8[%c0_15, %c0_16] : memref<64x64xbf16, #tpu.memory_space<vmem>>, vector<64x64xbf16>
    %cst_17 = arith.constant dense<0.000000e+00> : vector<8x64xf32>
    %24 = tpu.matmul %22, %23, %cst_17 {dimension_numbers = #tpu.dot_dimension_numbers<[1], [0], [0], [1], [0, 0, 1, 1], [], []>} : vector<8x64xbf16>, vector<64x64xbf16>, vector<8x64xf32> -> vector<8x64xf32>
    %c0_18 = arith.constant 0 : index
    %c0_19 = arith.constant 0 : index
    %25 = vector.load %arg9[%c0_18, %c0_19] : memref<1x64xf32, #tpu.memory_space<vmem>>, vector<1x64xf32>
    %26 = vector.broadcast %25 : vector<1x64xf32> to vector<8x64xf32>
    %27 = arith.addf %24, %26 : vector<8x64xf32>
    %28 = arith.truncf %27 : vector<8x64xf32> to vector<8x64xbf16>
    %29 = math.tanh %28 : vector<8x64xbf16>
    %c0_20 = arith.constant 0 : index
    %c0_21 = arith.constant 0 : index
    %30 = vector.load %arg10[%c0_20, %c0_21] : memref<64x16xbf16, #tpu.memory_space<vmem>>, vector<64x16xbf16>
    %cst_22 = arith.constant dense<0.000000e+00> : vector<8x16xf32>
    %31 = tpu.matmul %29, %30, %cst_22 {dimension_numbers = #tpu.dot_dimension_numbers<[1], [0], [0], [1], [0, 0, 1, 1], [], []>} : vector<8x64xbf16>, vector<64x16xbf16>, vector<8x16xf32> -> vector<8x16xf32>
    %c0_23 = arith.constant 0 : index
    %c0_24 = arith.constant 0 : index
    %32 = vector.load %arg11[%c0_23, %c0_24] : memref<1x16xf32, #tpu.memory_space<vmem>>, vector<1x16xf32>
    %33 = vector.broadcast %32 : vector<1x16xf32> to vector<8x16xf32>
    %34 = arith.addf %31, %33 : vector<8x16xf32>
    %c0_25 = arith.constant 0 : index
    %c0_26 = arith.constant 0 : index
    %35 = vector.load %arg12[%c0_25, %c0_26] : memref<8x16xf32, #tpu.memory_space<vmem>>, vector<8x16xf32>
    tpu.vector_store %arg12[%c0_25, %c0_26], %34 {strides = array<i32>} : memref<8x16xf32, #tpu.memory_space<vmem>>, vector<8x16xf32>,
    return
  }
  func.func @transform_0(%arg0: i32) -> (i32, i32) {
    %c0_i32 = arith.constant 0 : i32
    %c0_i32_0 = arith.constant 0 : i32
    return %arg0, %c0_i32 : i32, i32
  }
  func.func @transform_1(%arg0: i32) -> (i32, i32) {
    %c0_i32 = arith.constant 0 : i32
    %c0_i32_0 = arith.constant 0 : i32
    %c0_i32_1 = arith.constant 0 : i32
    return %c0_i32, %c0_i32_0 : i32, i32
  }
  func.func @transform_2(%arg0: i32) -> (i32, i32) {
    %c0_i32 = arith.constant 0 : i32
    %c0_i32_0 = arith.constant 0 : i32
    %c0_i32_1 = arith.constant 0 : i32
    return %c0_i32, %c0_i32_0 : i32, i32
  }
  func.func @transform_3(%arg0: i32) -> (i32, i32) {
    %c0_i32 = arith.constant 0 : i32
    %c0_i32_0 = arith.constant 0 : i32
    %c0_i32_1 = arith.constant 0 : i32
    return %c0_i32, %c0_i32_0 : i32, i32
  }
  func.func @transform_4(%arg0: i32) -> (i32, i32) {
    %c0_i32 = arith.constant 0 : i32
    %c0_i32_0 = arith.constant 0 : i32
    %c0_i32_1 = arith.constant 0 : i32
    return %c0_i32, %c0_i32_0 : i32, i32
  }
  func.func @transform_5(%arg0: i32) -> (i32, i32) {
    %c0_i32 = arith.constant 0 : i32
    %c0_i32_0 = arith.constant 0 : i32
    %c0_i32_1 = arith.constant 0 : i32
    return %c0_i32, %c0_i32_0 : i32, i32
  }
  func.func @transform_6(%arg0: i32) -> (i32, i32) {
    %c0_i32 = arith.constant 0 : i32
    %c0_i32_0 = arith.constant 0 : i32
    %c0_i32_1 = arith.constant 0 : i32
    return %c0_i32, %c0_i32_0 : i32, i32
  }
  func.func @transform_7(%arg0: i32) -> (i32, i32) {
    %c0_i32 = arith.constant 0 : i32
    %c0_i32_0 = arith.constant 0 : i32
    %c0_i32_1 = arith.constant 0 : i32
    return %c0_i32, %c0_i32_0 : i32, i32
  }
  func.func @transform_8(%arg0: i32) -> (i32, i32) {
    %c0_i32 = arith.constant 0 : i32
    %c0_i32_0 = arith.constant 0 : i32
    %c0_i32_1 = arith.constant 0 : i32
    return %c0_i32, %c0_i32_0 : i32, i32
  }
  func.func @transform_9(%arg0: i32) -> (i32, i32) {
    %c0_i32 = arith.constant 0 : i32
    %c0_i32_0 = arith.constant 0 : i32
    %c0_i32_1 = arith.constant 0 : i32
    return %c0_i32, %c0_i32_0 : i32, i32
  }
  func.func @transform_10(%arg0: i32) -> (i32, i32) {
    %c0_i32 = arith.constant 0 : i32
    %c0_i32_0 = arith.constant 0 : i32
    %c0_i32_1 = arith.constant 0 : i32
    return %c0_i32, %c0_i32_0 : i32, i32
  }
  func.func @transform_11(%arg0: i32) -> (i32, i32) {
    %c0_i32 = arith.constant 0 : i32
    %c0_i32_0 = arith.constant 0 : i32
    return %arg0, %c0_i32 : i32, i32
  }
}

</mosaic_0001>

<llo_original>
// kernel: tpu_custom_call.1
$region0: #{tpu_custom_call.1}
  #allocation0 [shape = 'u32[]', space=smem, size = 0x4, offset = 0x4, fixed_abs, tag = 'smem constant byte address 0x4 - core index']
  #allocation1 [shape = 'u32[144,128]{1,0:T(1,128)}', space=vmem, size = 0x12000, scoped, tag = 'internal scratch']
  %s0 = inlined_call_operand.hbm [shape: f32[8,32], index: 0, kind: input, shape index: {}]
  %s1 = inlined_call_operand.hbm [shape: bf16[32,64], index: 1, kind: input, shape index: {}]
  %s2 = inlined_call_operand.vmem [shape: f32[1,64], index: 2, kind: input, shape index: {}]
  %s3 = inlined_call_operand.vmem [shape: bf16[64,64], index: 3, kind: input, shape index: {}]
  %s4 = inlined_call_operand.vmem [shape: f32[1,64], index: 4, kind: input, shape index: {}]
  %s5 = inlined_call_operand.hbm [shape: bf16[64,64], index: 5, kind: input, shape index: {}]
  %s6 = inlined_call_operand.hbm [shape: f32[1,64], index: 6, kind: input, shape index: {}]
  %s7 = inlined_call_operand.vmem [shape: bf16[64,64], index: 7, kind: input, shape index: {}]
  %s8 = inlined_call_operand.hbm [shape: f32[1,64], index: 8, kind: input, shape index: {}]
  %s9 = inlined_call_operand.vmem [shape: bf16[64,16], index: 9, kind: input, shape index: {}]
  %s10 = inlined_call_operand.vmem [shape: f32[1,16], index: 10, kind: input, shape index: {}]
  %s11 = inlined_call_operand.hbm [shape: f32[8,16], index: 11, kind: output, shape index: {}]
  %s12 = sld [smem:[#allocation0]]
  $region74: #{tpu_custom_call.1} parent=0
    _
  %s14 = ssub.s32 1, %s12
  %s15 = scalar_select 0, %s14, %s12
  $region1: #{tpu_custom_call.1} parent=0
    #allocation2 [shape = 'u8[4096]{0}', space=vmem, size = 0x1000, scoped, tag = 'input window, operand 0, single buffered']
    #allocation3 [shape = 's32[1]{0}', space=sflag, size = 0x4, scoped, tag = 'scoped memory for tpu_custom_call.1']
    #allocation4 [shape = 's32[1]{0}', space=sflag, size = 0x4, scoped, tag = 'scoped memory for tpu_custom_call.1']
    #allocation5 [shape = 'u8[8192]{0}', space=vmem, size = 0x2000, scoped, tag = 'input window, operand 1, single buffered']
    #allocation6 [shape = 's32[1]{0}', space=sflag, size = 0x4, scoped, tag = 'scoped memory for tpu_custom_call.1']
    #allocation7 [shape = 'u8[16384]{0}', space=vmem, size = 0x4000, scoped, tag = 'input window, operand 5, single buffered']
    #allocation8 [shape = 'u8[512]{0}', space=vmem, size = 0x400, scoped, tag = 'input window, operand 6, single buffered']
    #allocation9 [shape = 's32[1]{0}', space=sflag, size = 0x4, scoped, tag = 'scoped memory for tpu_custom_call.1']
    #allocation10 [shape = 'u8[512]{0}', space=vmem, size = 0x400, scoped, tag = 'input window, operand 8, single buffered']
    #allocation11 [shape = 'u8[4096]{0}', space=vmem, size = 0x1000, scoped, tag = 'output window, operand 0, single buffered']
    %16 = vsyncpa [#allocation3], 0
    %17 = vsyncpa [#allocation6], 0
    %18 = vsyncpa [#allocation9], 0
    %19 = vsyncpa [#allocation4], 0
    // Predicated region
    $region2: #{tpu_custom_call.1} parent=1 // pred_check
      _
    $region3: #{tpu_custom_call.1} parent=1 // pred_check_branch
      %21 = sbr.rel (0) target = $region5
    $region4: #{tpu_custom_call.1} parent=1 // pred_region
      %s23 = ssub.s32 128, 128
      %24 = vsyncadd [#allocation3], %s23
      %s26 = sshll.u32 [#allocation2], 4
      %s27 = int_to_ptr.vmem [resolvable:$true] %s26
      %29 = dma.hbm_to_vmem [thread:$0]  %s0, 128, %s27, [#allocation3]
    $region5: #{tpu_custom_call.1} parent=1 // pred_fallthru
      _
    // Predicated region
    $region6: #{tpu_custom_call.1} parent=1 // pred_check
      _
    $region7: #{tpu_custom_call.1} parent=1 // pred_check_branch
      %31 = sbr.rel (0) target = $region9
    $region8: #{tpu_custom_call.1} parent=1 // pred_region
      %s33 = ssub.s32 256, 256
      %34 = vsyncadd [#allocation6], %s33
      %s35 = sshll.u32 [#allocation5], 4
      %s36 = int_to_ptr.vmem [resolvable:$true] %s35
      %41 = dma.hbm_to_vmem [thread:$0]  %s1, 256, %s36, [#allocation6], 64, 64, 4
    $region9: #{tpu_custom_call.1} parent=1 // pred_fallthru
      _
    // Predicated region
    $region10: #{tpu_custom_call.1} parent=1 // pred_check
      _
    $region11: #{tpu_custom_call.1} parent=1 // pred_check_branch
      %43 = sbr.rel (0) target = $region13
    $region12: #{tpu_custom_call.1} parent=1 // pred_region
      _
    $region13: #{tpu_custom_call.1} parent=1 // pred_fallthru
      _
    // Predicated region
    $region14: #{tpu_custom_call.1} parent=1 // pred_check
      _
    $region15: #{tpu_custom_call.1} parent=1 // pred_check_branch
      %45 = sbr.rel (0) target = $region17
    $region16: #{tpu_custom_call.1} parent=1 // pred_region
      _
    $region17: #{tpu_custom_call.1} parent=1 // pred_fallthru
      _
    // Predicated region
    $region18: #{tpu_custom_call.1} parent=1 // pred_check
      _
    $region19: #{tpu_custom_call.1} parent=1 // pred_check_branch
      %47 = sbr.rel (0) target = $region21
    $region20: #{tpu_custom_call.1} parent=1 // pred_region
      _
    $region21: #{tpu_custom_call.1} parent=1 // pred_fallthru
      _
    // Predicated region
    $region22: #{tpu_custom_call.1} parent=1 // pred_check
      _
    $region23: #{tpu_custom_call.1} parent=1 // pred_check_branch
      %49 = sbr.rel (0) target = $region25
    $region24: #{tpu_custom_call.1} parent=1 // pred_region
      %s51 = ssub.s32 512, 512
      %52 = vsyncadd [#allocation6], %s51
      %s53 = sshll.u32 [#allocation7], 4
      %s54 = int_to_ptr.vmem [resolvable:$true] %s53
      %59 = dma.hbm_to_vmem [thread:$0]  %s5, 512, %s54, [#allocation6], 64, 64, 4
    $region25: #{tpu_custom_call.1} parent=1 // pred_fallthru
      _
    // Predicated region
    $region26: #{tpu_custom_call.1} parent=1 // pred_check
      _
    $region27: #{tpu_custom_call.1} parent=1 // pred_check_branch
      %61 = sbr.rel (0) target = $region29
    $region28: #{tpu_custom_call.1} parent=1 // pred_region
      %s63 = ssub.s32 16, 16
      %64 = vsyncadd [#allocation9], %s63
      %s66 = sshll.u32 [#allocation8], 4
      %s67 = int_to_ptr.vmem [resolvable:$true] %s66
      %69 = dma.hbm_to_vmem [thread:$0]  %s6, 16, %s67, [#allocation9]
    $region29: #{tpu_custom_call.1} parent=1 // pred_fallthru
      _
    // Predicated region
    $region30: #{tpu_custom_call.1} parent=1 // pred_check
      _
    $region31: #{tpu_custom_call.1} parent=1 // pred_check_branch
      %71 = sbr.rel (0) target = $region33
    $region32: #{tpu_custom_call.1} parent=1 // pred_region
      _
    $region33: #{tpu_custom_call.1} parent=1 // pred_fallthru
      _
    // Predicated region
    $region34: #{tpu_custom_call.1} parent=1 // pred_check
      _
    $region35: #{tpu_custom_call.1} parent=1 // pred_check_branch
      %73 = sbr.rel (0) target = $region37
    $region36: #{tpu_custom_call.1} parent=1 // pred_region
      %s75 = ssub.s32 16, 16
      %76 = vsyncadd [#allocation9], %s75
      %s78 = sshll.u32 [#allocation10], 4
      %s79 = int_to_ptr.vmem [resolvable:$true] %s78
      %81 = dma.hbm_to_vmem [thread:$0]  %s8, 16, %s79, [#allocation9]
    $region37: #{tpu_custom_call.1} parent=1 // pred_fallthru
      _
    // Predicated region
    $region38: #{tpu_custom_call.1} parent=1 // pred_check
      _
    $region39: #{tpu_custom_call.1} parent=1 // pred_check_branch
      %83 = sbr.rel (0) target = $region41
    $region40: #{tpu_custom_call.1} parent=1 // pred_region
      _
    $region41: #{tpu_custom_call.1} parent=1 // pred_fallthru
      _
    // Predicated region
    $region42: #{tpu_custom_call.1} parent=1 // pred_check
      _
    $region43: #{tpu_custom_call.1} parent=1 // pred_check_branch
      %85 = sbr.rel (0) target = $region45
    $region44: #{tpu_custom_call.1} parent=1 // pred_region
      _
    $region45: #{tpu_custom_call.1} parent=1 // pred_fallthru
      _
    // Predicated region
    $region46: #{tpu_custom_call.1} parent=1 // pred_check
      _
    $region47: #{tpu_custom_call.1} parent=1 // pred_check_branch
      %87 = sbr.rel (0) target = $region49
    $region48: #{tpu_custom_call.1} parent=1 // pred_region
      %88 = dma.done [#allocation3], 128
    $region49: #{tpu_custom_call.1} parent=1 // pred_fallthru
      _
    // Predicated region
    $region50: #{tpu_custom_call.1} parent=1 // pred_check
      _
    $region51: #{tpu_custom_call.1} parent=1 // pred_check_branch
      %90 = sbr.rel (0) target = $region53
    $region52: #{tpu_custom_call.1} parent=1 // pred_region
      %91 = dma.done [#allocation6], 256
    $region53: #{tpu_custom_call.1} parent=1 // pred_fallthru
      _
    // Predicated region
    $region54: #{tpu_custom_call.1} parent=1 // pred_check
      _
    $region55: #{tpu_custom_call.1} parent=1 // pred_check_branch
      %93 = sbr.rel (0) target = $region57
    $region56: #{tpu_custom_call.1} parent=1 // pred_region
      %94 = dma.done [#allocation6], 512
    $region57: #{tpu_custom_call.1} parent=1 // pred_fallthru
      _
    // Predicated region
    $region58: #{tpu_custom_call.1} parent=1 // pred_check
      _
    $region59: #{tpu_custom_call.1} parent=1 // pred_check_branch
      %96 = sbr.rel (0) target = $region61
    $region60: #{tpu_custom_call.1} parent=1 // pred_region
      %97 = dma.done [#allocation9], 16
    $region61: #{tpu_custom_call.1} parent=1 // pred_fallthru
      _
    // Predicated region
    $region62: #{tpu_custom_call.1} parent=1 // pred_check
      _
    $region63: #{tpu_custom_call.1} parent=1 // pred_check_branch
      %99 = sbr.rel (0) target = $region65
    $region64: #{tpu_custom_call.1} parent=1 // pred_region
      %100 = dma.done [#allocation9], 16
    $region65: #{tpu_custom_call.1} parent=1 // pred_fallthru
      _
    %v102 = vld [vmem:[#allocation2] sm:$0xff]
    %v103 = vpack.c.bf16 %v102, %v102
    %v104 = vld [vmem:[#allocation5] sm:$0xf]
    %v105 = vld [vmem:[#allocation5 + $0x4] sm:$0xf]
    %v106 = vld [vmem:[#allocation5 + $0x8] sm:$0xf]
    %v107 = vld [vmem:[#allocation5 + $0xc] sm:$0xf]
    %v108 = vld [vmem:[%s2] sm:$0x1]
    %v110 = vlaneseq
    %v111 = vshrl.u32 %v110, 7
    %v112 = vsub.s32 0, %v111
    %v113 = vrot.slane %v108, %v112
    %v119 = vunpack.c.l.b16 %v104
    %v120 = vunpack.c.l.b16 %v105
    %v121 = vunpack.c.l.b16 %v106
    %v122 = vunpack.c.l.b16 %v107
    %v123 = vpack.c.b16 %v120, %v119
    %v124 = vpack.c.b16 %v122, %v121
    %vm127 = vcmask 261120
    %v129 = vsel %vm127, %v103, 0
    %131 = vmatprep.subr.bf16.mxu0 0
    %132 = vmatpush1.bf16.msra.mxu0 %v123
    %133 = vmatprep.subr.bf16.mxu0 0
    %134 = vmatpush1.bf16.msra.mxu0 %v124
    %135 = vmatprep.subr.bf16.mxu0 0
    %136 = vmatpush1.bf16.msra.mxu0 0
    %137 = vmatprep.subr.bf16.mxu0 0
    %138 = vmatpush1.bf16.msra.mxu0 0
    %139 = vmatprep.subr.bf16.mxu0 0
    %140 = vmatpush1.bf16.msra.mxu0 0
    %141 = vmatprep.subr.bf16.mxu0 0
    %142 = vmatpush1.bf16.msra.mxu0 0
    %143 = vmatprep.subr.bf16.mxu0 0
    %144 = vmatpush1.bf16.msra.mxu0 0
    %145 = vmatprep.subr.bf16.mxu0 0
    %146 = vmatpush1.bf16.msra.mxu0 0
    %147 = vmatprep.subr.bf16.mxu0 0
    %148 = vmatpush1.bf16.msra.mxu0 0
    %149 = vmatprep.subr.bf16.mxu0 0
    %150 = vmatpush1.bf16.msra.mxu0 0
    %151 = vmatprep.subr.bf16.mxu0 0
    %152 = vmatpush1.bf16.msra.mxu0 0
    %153 = vmatprep.subr.bf16.mxu0 0
    %154 = vmatpush1.bf16.msra.mxu0 0
    %155 = vmatprep.subr.bf16.mxu0 0
    %156 = vmatpush1.bf16.msra.mxu0 0
    %157 = vmatprep.subr.bf16.mxu0 0
    %158 = vmatpush1.bf16.msra.mxu0 0
    %159 = vmatprep.subr.bf16.mxu0 0
    %160 = vmatpush1.bf16.msra.mxu0 0
    %161 = vmatprep.subr.bf16.mxu0 0
    %162 = vmatpush1.bf16.msra.mxu0 0
    %163 = vmatprep.mubr.bf16.mxu0 0
    %164 = vmatmul.mubr.bf16.gmra.mrb[0].mxu0 %v129
    %v165 = vpop.f32.mrb[0].mxu0
    %v166 = vadd.f32 %v113, %v165
    %v167 = vpop.f32.mrb[0].mxu0
    %v168 = vpop.f32.mrb[0].mxu0
    %v169 = vpop.f32.mrb[0].mxu0
    %170 = vdwg.mxu0
    %v171 = vpack.c.bf16 %v166, %v166
    %v172 = vtanh.bf16.pop %v171
    %v173 = vld [vmem:[%s3] sm:$0xf]
    %v174 = vld [vmem:[%s3 + $0x4] sm:$0xf]
    %v175 = vld [vmem:[%s3 + $0x8] sm:$0xf]
    %v176 = vld [vmem:[%s3 + $0xc] sm:$0xf]
    %v177 = vld [vmem:[%s3 + $0x10] sm:$0xf]
    %v178 = vld [vmem:[%s3 + $0x14] sm:$0xf]
    %v179 = vld [vmem:[%s3 + $0x18] sm:$0xf]
    %v180 = vld [vmem:[%s3 + $0x1c] sm:$0xf]
    %v181 = vld [vmem:[%s4] sm:$0x1]
    %v183 = vlaneseq
    %v184 = vshrl.u32 %v183, 7
    %v185 = vsub.s32 0, %v184
    %v186 = vrot.slane %v181, %v185
    %v196 = vunpack.c.l.b16 %v173
    %v197 = vunpack.c.l.b16 %v174
    %v198 = vunpack.c.l.b16 %v175
    %v199 = vunpack.c.l.b16 %v176
    %v200 = vunpack.c.l.b16 %v177
    %v201 = vunpack.c.l.b16 %v178
    %v202 = vunpack.c.l.b16 %v179
    %v203 = vunpack.c.l.b16 %v180
    %v204 = vpack.c.b16 %v197, %v196
    %v205 = vpack.c.b16 %v199, %v198
    %v206 = vpack.c.b16 %v201, %v200
    %v207 = vpack.c.b16 %v203, %v202
    %vm212 = vcmask 523264
    %v214 = vsel %vm212, %v172, 0
    %216 = vmatprep.subr.bf16.mxu0 0
    %217 = vmatpush1.bf16.msra.mxu0 %v204
    %218 = vmatprep.subr.bf16.mxu0 0
    %219 = vmatpush1.bf16.msra.mxu0 %v205
    %220 = vmatprep.subr.bf16.mxu0 0
    %221 = vmatpush1.bf16.msra.mxu0 %v206
    %222 = vmatprep.subr.bf16.mxu0 0
    %223 = vmatpush1.bf16.msra.mxu0 %v207
    %224 = vmatprep.subr.bf16.mxu0 0
    %225 = vmatpush1.bf16.msra.mxu0 0
    %226 = vmatprep.subr.bf16.mxu0 0
    %227 = vmatpush1.bf16.msra.mxu0 0
    %228 = vmatprep.subr.bf16.mxu0 0
    %229 = vmatpush1.bf16.msra.mxu0 0
    %230 = vmatprep.subr.bf16.mxu0 0
    %231 = vmatpush1.bf16.msra.mxu0 0
    %232 = vmatprep.subr.bf16.mxu0 0
    %233 = vmatpush1.bf16.msra.mxu0 0
    %234 = vmatprep.subr.bf16.mxu0 0
    %235 = vmatpush1.bf16.msra.mxu0 0
    %236 = vmatprep.subr.bf16.mxu0 0
    %237 = vmatpush1.bf16.msra.mxu0 0
    %238 = vmatprep.subr.bf16.mxu0 0
    %239 = vmatpush1.bf16.msra.mxu0 0
    %240 = vmatprep.subr.bf16.mxu0 0
    %241 = vmatpush1.bf16.msra.mxu0 0
    %242 = vmatprep.subr.bf16.mxu0 0
    %243 = vmatpush1.bf16.msra.mxu0 0
    %244 = vmatprep.subr.bf16.mxu0 0
    %245 = vmatpush1.bf16.msra.mxu0 0
    %246 = vmatprep.subr.bf16.mxu0 0
    %247 = vmatpush1.bf16.msra.mxu0 0
    %248 = vmatprep.mubr.bf16.mxu0 0
    %249 = vmatmul.mubr.bf16.gmra.mrb[0].mxu0 %v214
    %v250 = vpop.f32.mrb[0].mxu0
    %v251 = vadd.f32 %v186, %v250
    %v252 = vpop.f32.mrb[0].mxu0
    %v253 = vpop.f32.mrb[0].mxu0
    %v254 = vpop.f32.mrb[0].mxu0
    %255 = vdwg.mxu0
    %v256 = vpack.c.bf16 %v251, %v251
    %v257 = vtanh.bf16.pop %v256
    %v258 = vld [vmem:[#allocation7] sm:$0xf]
    %v259 = vld [vmem:[#allocation7 + $0x4] sm:$0xf]
    %v260 = vld [vmem:[#allocation7 + $0x8] sm:$0xf]
    %v261 = vld [vmem:[#allocation7 + $0xc] sm:$0xf]
    %v262 = vld [vmem:[#allocation7 + $0x10] sm:$0xf]
    %v263 = vld [vmem:[#allocation7 + $0x14] sm:$0xf]
    %v264 = vld [vmem:[#allocation7 + $0x18] sm:$0xf]
    %v265 = vld [vmem:[#allocation7 + $0x1c] sm:$0xf]
    %v266 = vld [vmem:[#allocation8] sm:$0x1]
    %v268 = vlaneseq
    %v269 = vshrl.u32 %v268, 7
    %v270 = vsub.s32 0, %v269
    %v271 = vrot.slane %v266, %v270
    %v281 = vunpack.c.l.b16 %v258
    %v282 = vunpack.c.l.b16 %v259
    %v283 = vunpack.c.l.b16 %v260
    %v284 = vunpack.c.l.b16 %v261
    %v285 = vunpack.c.l.b16 %v262
    %v286 = vunpack.c.l.b16 %v263
    %v287 = vunpack.c.l.b16 %v264
    %v288 = vunpack.c.l.b16 %v265
    %v289 = vpack.c.b16 %v282, %v281
    %v290 = vpack.c.b16 %v284, %v283
    %v291 = vpack.c.b16 %v286, %v285
    %v292 = vpack.c.b16 %v288, %v287
    %v298 = vsel %vm212, %v257, 0
    %300 = vmatprep.subr.bf16.mxu0 0
    %301 = vmatpush1.bf16.msra.mxu0 %v289
    %302 = vmatprep.subr.bf16.mxu0 0
    %303 = vmatpush1.bf16.msra.mxu0 %v290
    %304 = vmatprep.subr.bf16.mxu0 0
    %305 = vmatpush1.bf16.msra.mxu0 %v291
    %306 = vmatprep.subr.bf16.mxu0 0
    %307 = vmatpush1.bf16.msra.mxu0 %v292
    %308 = vmatprep.subr.bf16.mxu0 0
    %309 = vmatpush1.bf16.msra.mxu0 0
    %310 = vmatprep.subr.bf16.mxu0 0
    %311 = vmatpush1.bf16.msra.mxu0 0
    %312 = vmatprep.subr.bf16.mxu0 0
    %313 = vmatpush1.bf16.msra.mxu0 0
    %314 = vmatprep.subr.bf16.mxu0 0
    %315 = vmatpush1.bf16.msra.mxu0 0
    %316 = vmatprep.subr.bf16.mxu0 0
    %317 = vmatpush1.bf16.msra.mxu0 0
    %318 = vmatprep.subr.bf16.mxu0 0
    %319 = vmatpush1.bf16.msra.mxu0 0
    %320 = vmatprep.subr.bf16.mxu0 0
    %321 = vmatpush1.bf16.msra.mxu0 0
    %322 = vmatprep.subr.bf16.mxu0 0
    %323 = vmatpush1.bf16.msra.mxu0 0
    %324 = vmatprep.subr.bf16.mxu0 0
    %325 = vmatpush1.bf16.msra.mxu0 0
    %326 = vmatprep.subr.bf16.mxu0 0
    %327 = vmatpush1.bf16.msra.mxu0 0
    %328 = vmatprep.subr.bf16.mxu0 0
    %329 = vmatpush1.bf16.msra.mxu0 0
    %330 = vmatprep.subr.bf16.mxu0 0
    %331 = vmatpush1.bf16.msra.mxu0 0
    %332 = vmatprep.mubr.bf16.mxu0 0
    %333 = vmatmul.mubr.bf16.gmra.mrb[0].mxu0 %v298
    %v334 = vpop.f32.mrb[0].mxu0
    %v335 = vadd.f32 %v271, %v334
    %v336 = vpop.f32.mrb[0].mxu0
    %v337 = vpop.f32.mrb[0].mxu0
    %v338 = vpop.f32.mrb[0].mxu0
    %339 = vdwg.mxu0
    %v340 = vpack.c.bf16 %v335, %v335
    %v341 = vtanh.bf16.pop %v340
    %v342 = vld [vmem:[%s7] sm:$0xf]
    %v343 = vld [vmem:[%s7 + $0x4] sm:$0xf]
    %v344 = vld [vmem:[%s7 + $0x8] sm:$0xf]
    %v345 = vld [vmem:[%s7 + $0xc] sm:$0xf]
    %v346 = vld [vmem:[%s7 + $0x10] sm:$0xf]
    %v347 = vld [vmem:[%s7 + $0x14] sm:$0xf]
    %v348 = vld [vmem:[%s7 + $0x18] sm:$0xf]
    %v349 = vld [vmem:[%s7 + $0x1c] sm:$0xf]
    %v350 = vld [vmem:[#allocation10] sm:$0x1]
    %v352 = vlaneseq
    %v353 = vshrl.u32 %v352, 7
    %v354 = vsub.s32 0, %v353
    %v355 = vrot.slane %v350, %v354
    %v365 = vunpack.c.l.b16 %v342
    %v366 = vunpack.c.l.b16 %v343
    %v367 = vunpack.c.l.b16 %v344
    %v368 = vunpack.c.l.b16 %v345
    %v369 = vunpack.c.l.b16 %v346
    %v370 = vunpack.c.l.b16 %v347
    %v371 = vunpack.c.l.b16 %v348
    %v372 = vunpack.c.l.b16 %v349
    %v373 = vpack.c.b16 %v366, %v365
    %v374 = vpack.c.b16 %v368, %v367
    %v375 = vpack.c.b16 %v370, %v369
    %v376 = vpack.c.b16 %v372, %v371
    %v382 = vsel %vm212, %v341, 0
    %384 = vmatprep.subr.bf16.mxu0 0
    %385 = vmatpush1.bf16.msra.mxu0 %v373
    %386 = vmatprep.subr.bf16.mxu0 0
    %387 = vmatpush1.bf16.msra.mxu0 %v374
    %388 = vmatprep.subr.bf16.mxu0 0
    %389 = vmatpush1.bf16.msra.mxu0 %v375
    %390 = vmatprep.subr.bf16.mxu0 0
    %391 = vmatpush1.bf16.msra.mxu0 %v376
    %392 = vmatprep.subr.bf16.mxu0 0
    %393 = vmatpush1.bf16.msra.mxu0 0
    %394 = vmatprep.subr.bf16.mxu0 0
    %395 = vmatpush1.bf16.msra.mxu0 0
    %396 = vmatprep.subr.bf16.mxu0 0
    %397 = vmatpush1.bf16.msra.mxu0 0
    %398 = vmatprep.subr.bf16.mxu0 0
    %399 = vmatpush1.bf16.msra.mxu0 0
    %400 = vmatprep.subr.bf16.mxu0 0
    %401 = vmatpush1.bf16.msra.mxu0 0
    %402 = vmatprep.subr.bf16.mxu0 0
    %403 = vmatpush1.bf16.msra.mxu0 0
    %404 = vmatprep.subr.bf16.mxu0 0
    %405 = vmatpush1.bf16.msra.mxu0 0
    %406 = vmatprep.subr.bf16.mxu0 0
    %407 = vmatpush1.bf16.msra.mxu0 0
    %408 = vmatprep.subr.bf16.mxu0 0
    %409 = vmatpush1.bf16.msra.mxu0 0
    %410 = vmatprep.subr.bf16.mxu0 0
    %411 = vmatpush1.bf16.msra.mxu0 0
    %412 = vmatprep.subr.bf16.mxu0 0
    %413 = vmatpush1.bf16.msra.mxu0 0
    %414 = vmatprep.subr.bf16.mxu0 0
    %415 = vmatpush1.bf16.msra.mxu0 0
    %416 = vmatprep.mubr.bf16.mxu0 0
    %417 = vmatmul.mubr.bf16.gmra.mrb[0].mxu0 %v382
    %v418 = vpop.f32.mrb[0].mxu0
    %v419 = vadd.f32 %v355, %v418
    %v420 = vpop.f32.mrb[0].mxu0
    %v421 = vpop.f32.mrb[0].mxu0
    %v422 = vpop.f32.mrb[0].mxu0
    %423 = vdwg.mxu0
    %v424 = vpack.c.bf16 %v419, %v419
    %v425 = vtanh.bf16.pop %v424
    %v426 = vld [vmem:[%s9] sm:$0xf]
    %v427 = vld [vmem:[%s9 + $0x4] sm:$0xf]
    %v428 = vld [vmem:[%s9 + $0x8] sm:$0xf]
    %v429 = vld [vmem:[%s9 + $0xc] sm:$0xf]
    %v430 = vld [vmem:[%s9 + $0x10] sm:$0xf]
    %v431 = vld [vmem:[%s9 + $0x14] sm:$0xf]
    %v432 = vld [vmem:[%s9 + $0x18] sm:$0xf]
    %v433 = vld [vmem:[%s9 + $0x1c] sm:$0xf]
    %v434 = vld [vmem:[%s10] sm:$0x1]
    %v436 = vlaneseq
    %v437 = vshrl.u32 %v436, 7
    %v438 = vsub.s32 0, %v437
    %v439 = vrot.slane %v434, %v438
    %v449 = vunpack.c.l.b16 %v426
    %v450 = vunpack.c.l.b16 %v427
    %v451 = vunpack.c.l.b16 %v428
    %v452 = vunpack.c.l.b16 %v429
    %v453 = vunpack.c.l.b16 %v430
    %v454 = vunpack.c.l.b16 %v431
    %v455 = vunpack.c.l.b16 %v432
    %v456 = vunpack.c.l.b16 %v433
    %v457 = vpack.c.b16 %v450, %v449
    %v458 = vpack.c.b16 %v452, %v451
    %v459 = vpack.c.b16 %v454, %v453
    %v460 = vpack.c.b16 %v456, %v455
    %v466 = vsel %vm212, %v425, 0
    %468 = vmatprep.subr.bf16.mxu0 0
    %469 = vmatpush1.bf16.msra.mxu0 %v457
    %470 = vmatprep.subr.bf16.mxu0 0
    %471 = vmatpush1.bf16.msra.mxu0 %v458
    %472 = vmatprep.subr.bf16.mxu0 0
    %473 = vmatpush1.bf16.msra.mxu0 %v459
    %474 = vmatprep.subr.bf16.mxu0 0
    %475 = vmatpush1.bf16.msra.mxu0 %v460
    %476 = vmatprep.subr.bf16.mxu0 0
    %477 = vmatpush1.bf16.msra.mxu0 0
    %478 = vmatprep.subr.bf16.mxu0 0
    %479 = vmatpush1.bf16.msra.mxu0 0
    %480 = vmatprep.subr.bf16.mxu0 0
    %481 = vmatpush1.bf16.msra.mxu0 0
    %482 = vmatprep.subr.bf16.mxu0 0
    %483 = vmatpush1.bf16.msra.mxu0 0
    %484 = vmatprep.subr.bf16.mxu0 0
    %485 = vmatpush1.bf16.msra.mxu0 0
    %486 = vmatprep.subr.bf16.mxu0 0
    %487 = vmatpush1.bf16.msra.mxu0 0
    %488 = vmatprep.subr.bf16.mxu0 0
    %489 = vmatpush1.bf16.msra.mxu0 0
    %490 = vmatprep.subr.bf16.mxu0 0
    %491 = vmatpush1.bf16.msra.mxu0 0
    %492 = vmatprep.subr.bf16.mxu0 0
    %493 = vmatpush1.bf16.msra.mxu0 0
    %494 = vmatprep.subr.bf16.mxu0 0
    %495 = vmatpush1.bf16.msra.mxu0 0
    %496 = vmatprep.subr.bf16.mxu0 0
    %497 = vmatpush1.bf16.msra.mxu0 0
    %498 = vmatprep.subr.bf16.mxu0 0
    %499 = vmatpush1.bf16.msra.mxu0 0
    %500 = vmatprep.mubr.bf16.mxu0 0
    %501 = vmatmul.mubr.bf16.gmra.mrb[0].mxu0 %v466
    %v502 = vpop.f32.mrb[0].mxu0
    %v503 = vadd.f32 %v439, %v502
    %v504 = vpop.f32.mrb[0].mxu0
    %v505 = vpop.f32.mrb[0].mxu0
    %v506 = vpop.f32.mrb[0].mxu0
    %507 = vdwg.mxu0
    %vm508 = vcmask 130048
    %509 = vst.msk [vmem:[#allocation11] sm:$0xff] %vm508, %v503
    // Predicated region
    $region66: #{tpu_custom_call.1} parent=1 // pred_check
      _
    $region67: #{tpu_custom_call.1} parent=1 // pred_check_branch
      %511 = sbr.rel (0) target = $region69
    $region68: #{tpu_custom_call.1} parent=1 // pred_region
      %s513 = ssub.s32 128, 128
      %514 = vsyncadd [#allocation4], %s513
      %s516 = sshll.u32 [#allocation11], 4
      %s517 = int_to_ptr.vmem [resolvable:$true] %s516
      %519 = dma.vmem_to_hbm [thread:$0]  %s517, 128, %s11, [#allocation4]
    $region69: #{tpu_custom_call.1} parent=1 // pred_fallthru
      _
    // Predicated region
    $region70: #{tpu_custom_call.1} parent=1 // pred_check
      _
    $region71: #{tpu_custom_call.1} parent=1 // pred_check_branch
      %521 = sbr.rel (0) target = $region73
    $region72: #{tpu_custom_call.1} parent=1 // pred_region
      %522 = dma.done [#allocation4], 128
    $region73: #{tpu_custom_call.1} parent=1 // pred_fallthru
      _
    %523 = vsyncpa [#allocation3], 1
    %524 = vsyncpa [#allocation6], 1
    %525 = vsyncpa [#allocation9], 1
    %526 = vsyncpa [#allocation4], 1

</llo_original>
